<compile_context>
chip_gen: v5e
topology: v5e:2x2
jax: 0.10.0
libtpu: 0.0.40
codegen_flags: <defaults>
</compile_context>

<pallas_src>
import functools

import jax
import jax.numpy as jnp
from jax.experimental import pallas as pl
from jax.experimental.pallas import tpu as pltpu


_LANE = 128      # TPU lane width; pad hidden/output dims to multiples of this.
_SUBLANE = 8     # sublane granularity for the batch (second-to-last) dim.
_TB_MAX = 1024   # max batch-tile rows (activation buffers stay ~1 MiB).


def _round_up(x, m):
    return ((x + m - 1) // m) * m


def _make_mlp_kernel(n_layer):
    """Fused MLP kernel for n_layer hidden layers (eval mode).

    Refs (in order): x, (w_i, b_i) * n_layer, w_pred, b_pred, out.
    Weights are already (in, out) layout, bf16, lane-dense padded, so the
    kernel is just dot -> bias -> ReLU with no in-kernel transposes.
    """

    def kernel(*refs):
        x_ref = refs[0]
        o_ref = refs[-1]

        h = x_ref[...]  # (tb, n_feature) f32
        for i in range(n_layer):
            w_ref = refs[1 + 2 * i]
            b_ref = refs[2 + 2 * i]
            acc = jnp.dot(h.astype(w_ref.dtype), w_ref[...],
                          preferred_element_type=jnp.float32)
            # Bias-add / ReLU in f32 (VPU; exact on v5e which lacks bf16 VALU).
            h = jnp.maximum(acc + b_ref[...], 0.0)
            # Dropout(p=0.25): identity in eval mode.

        wp_ref = refs[1 + 2 * n_layer]
        bp_ref = refs[2 + 2 * n_layer]
        out = jnp.dot(h.astype(wp_ref.dtype), wp_ref[...],
                      preferred_element_type=jnp.float32) + bp_ref[...]
        o_ref[...] = out.astype(o_ref.dtype)

    return kernel


def init_params(key, n_feature, n_hidden, n_layer, n_output, dtype=jnp.float32):
    """PyTorch-style parameter init; weights are (out_features, in_features)."""

    def linear(key, fan_in, fan_out):
        kw, kb = jax.random.split(key)
        bound = 1.0 / jnp.sqrt(jnp.asarray(fan_in, dtype))
        w = jax.random.uniform(kw, (fan_out, fan_in), dtype, -bound, bound)
        b = jax.random.uniform(kb, (fan_out,), dtype, -bound, bound)
        return w, b

    keys = jax.random.split(key, n_layer + 1)
    params = []
    in_dim = n_feature
    for i in range(n_layer):
        w, b = linear(keys[i], in_dim, n_hidden)
        params += [w, b]
        in_dim = n_hidden
    wp, bp = linear(keys[-1], in_dim, n_output)
    params += [wp, bp]
    return params


def pack_params(params, n_layer, weight_dtype=jnp.bfloat16):
    """One-time host-side layout prep for the kernel.

    Transposes each torch-layout (out, in) weight to (in, out), casts it to
    bf16 (f32 accumulation happens in-kernel), and zero-pads the output dim
    (and, except for the first layer, the input dim) to multiples of 128.
    The first layer keeps its input dim un-padded so x never needs a host-side
    feature pad.  Biases stay f32 as (1, out_pad) rows.  Zero padding keeps
    the math exact: padded weight rows/cols and bias entries are zero and
    ReLU(0)=0, so padded hidden/output lanes stay exactly zero.
    """
    packed = []
    for li in range(n_layer + 1):
        w, b = params[2 * li], params[2 * li + 1]
        out_f, in_f = w.shape
        in_p = in_f if li == 0 else _round_up(in_f, _LANE)
        out_p = _round_up(out_f, _LANE)
        w_t = jnp.zeros((in_p, out_p), weight_dtype).at[:in_f, :out_f].set(
            w.T.astype(weight_dtype))
        b_p = jnp.zeros((1, out_p), jnp.float32).at[0, :out_f].set(
            b.astype(jnp.float32))
        packed += [w_t, b_p]
    return packed


def _resident_spec(shape):
    """Whole-array VMEM-resident BlockSpec, single-buffered (fetched once)."""
    rank = len(shape)
    return pl.BlockSpec(shape, lambda i, _r=rank: (0,) * _r,
                        pipeline_mode=pl.Buffered(1))


@functools.partial(jax.jit, static_argnames=("n_layer", "n_output"))
def net_forward(x, packed_params, n_layer, n_output):
    """Fused MLP forward via one gridded Pallas call."""
    batch, n_feature = x.shape
    assert packed_params[0].shape[0] == n_feature
    out_pad = packed_params[-2].shape[1]            # padded output dim
    h_pad_max = max(p.shape[1] for p in packed_params[::2])

    # --- Batch tiling -------------------------------------------------------
    # >=2 grid steps whenever there is enough batch so the "parallel" axis can
    # feed both v7x TensorCores; tiles capped at _TB_MAX rows; tile size picked
    # as cdiv(batch, n_steps) rounded to 8 to keep padding waste small.
    batch8 = _round_up(batch, _SUBLANE)
    if batch8 <= _SUBLANE:
        n_steps = 1
    else:
        n_steps = max(2, pl.cdiv(batch8, _TB_MAX))
    tb = _round_up(pl.cdiv(batch8, n_steps), _SUBLANE)
    batch_pad = tb * n_steps

    x_in = x
    if batch_pad != batch:
        x_in = jnp.zeros((batch_pad, n_feature), x.dtype).at[:batch].set(x)

    in_specs = [pl.BlockSpec((tb, n_feature), lambda i: (i, 0))]
    in_specs += [_resident_spec(p.shape) for p in packed_params]
    out_spec = pl.BlockSpec((tb, out_pad), lambda i: (i, 0))

    # --- VMEM budget from the actual footprint ------------------------------
    # single-buffered weights + double-buffered x/out blocks + activation slack,
    # clamped to 16..48 MiB (fits v7x's 64 MiB/TC with headroom).
    w_bytes = sum(int(p.size) * p.dtype.itemsize for p in packed_params)
    act_bytes = tb * (2 * n_feature + 2 * out_pad + 4 * h_pad_max) * 4
    vmem_bytes = int(min(max(w_bytes + act_bytes + (4 << 20), 16 << 20), 48 << 20))

    out_p = pl.pallas_call(
        _make_mlp_kernel(n_layer),
        out_shape=jax.ShapeDtypeStruct((batch_pad, out_pad), jnp.float32),
        grid=(n_steps,),
        in_specs=in_specs,
        out_specs=out_spec,
        compiler_params=pltpu.CompilerParams(
            dimension_semantics=("parallel",),
            vmem_limit_bytes=vmem_bytes,
        ),
    )(x_in, *packed_params)

    if batch_pad != batch or out_pad != n_output:
        out_p = out_p[:batch, :n_output]
    return out_p


def net_forward_ref(x, params, n_layer):
    """Pure-JAX f32 reference (eval mode, torch-layout params)."""
    h = x
    for i in range(n_layer):
        w, b = params[2 * i], params[2 * i + 1]
        h = jnp.maximum(h @ w.T + b, 0.0)
    wp, bp = params[-2], params[-1]
    return h @ wp.T + bp


if __name__ == "__main__":
    # Small shapes consistent with the module's forward: x is (batch, n_feature).
    batch, n_feature, n_hidden, n_output = 8, 16, 32, 4
    n_layer = 3

    key = jax.random.PRNGKey(0)
    kx, kp = jax.random.split(key)
    x = jax.random.normal(kx, (batch, n_feature), jnp.float32)

    params = init_params(kp, n_feature, n_hidden, n_layer, n_output)
    packed = pack_params(params, n_layer)   # one-time transpose + pad + bf16 cast

    out = net_forward(x, packed, n_layer, n_output)
    out = jax.block_until_ready(out)

    ref = net_forward_ref(x, params, n_layer)
    assert out.shape == (batch, n_output)
    # bf16 MXU inputs with f32 accumulation: tolerance relaxed accordingly.
    assert jnp.allclose(out, ref, atol=3e-2, rtol=3e-2), "mismatch vs reference"

    print("KERNEL_OK")
</pallas_src>

<mosaic_0001>
module attributes {stable_mosaic.version = 11 : i64} {
  func.func @kernel(%arg0: i32, %arg1: memref<8x16xf32, #tpu.memory_space<vmem>>, %arg2: memref<16x128xbf16, #tpu.memory_space<vmem>>, %arg3: memref<1x128xf32, #tpu.memory_space<vmem>>, %arg4: memref<128x128xbf16, #tpu.memory_space<vmem>>, %arg5: memref<1x128xf32, #tpu.memory_space<vmem>>, %arg6: memref<128x128xbf16, #tpu.memory_space<vmem>>, %arg7: memref<1x128xf32, #tpu.memory_space<vmem>>, %arg8: memref<128x128xbf16, #tpu.memory_space<vmem>>, %arg9: memref<1x128xf32, #tpu.memory_space<vmem>>, %arg10: memref<8x128xf32, #tpu.memory_space<vmem>>) attributes {dimension_semantics = [#tpu.dimension_semantics<parallel>], iteration_bounds = array<i64: 1>, scalar_prefetch = 0 : i64, scratch_operands = 0 : i64, tpu.core_type = #tpu.core_type<tc>, window_params = [{transform_indices = @transform_0, window_bounds = array<i64: 8, 16>}, {pipeline_mode = #tpu.pipeline_mode<synchronous>, transform_indices = @transform_1, window_bounds = array<i64: 16, 128>}, {pipeline_mode = #tpu.pipeline_mode<synchronous>, transform_indices = @transform_2, window_bounds = array<i64: 1, 128>}, {pipeline_mode = #tpu.pipeline_mode<synchronous>, transform_indices = @transform_3, window_bounds = array<i64: 128, 128>}, {pipeline_mode = #tpu.pipeline_mode<synchronous>, transform_indices = @transform_4, window_bounds = array<i64: 1, 128>}, {pipeline_mode = #tpu.pipeline_mode<synchronous>, transform_indices = @transform_5, window_bounds = array<i64: 128, 128>}, {pipeline_mode = #tpu.pipeline_mode<synchronous>, transform_indices = @transform_6, window_bounds = array<i64: 1, 128>}, {pipeline_mode = #tpu.pipeline_mode<synchronous>, transform_indices = @transform_7, window_bounds = array<i64: 128, 128>}, {pipeline_mode = #tpu.pipeline_mode<synchronous>, transform_indices = @transform_8, window_bounds = array<i64: 1, 128>}, {transform_indices = @transform_9, window_bounds = array<i64: 8, 128>}]} {
    %c0 = arith.constant 0 : index
    %c0_0 = arith.constant 0 : index
    %0 = vector.load %arg1[%c0, %c0_0] : memref<8x16xf32, #tpu.memory_space<vmem>>, vector<8x16xf32>
    %1 = arith.truncf %0 : vector<8x16xf32> to vector<8x16xbf16>
    %c0_1 = arith.constant 0 : index
    %c0_2 = arith.constant 0 : index
    %2 = vector.load %arg2[%c0_1, %c0_2] : memref<16x128xbf16, #tpu.memory_space<vmem>>, vector<16x128xbf16>
    %cst = arith.constant dense<0.000000e+00> : vector<8x128xf32>
    %3 = tpu.matmul %1, %2, %cst {dimension_numbers = #tpu.dot_dimension_numbers<[1], [0], [0], [1], [0, 0, 1, 1], [], []>} : vector<8x16xbf16>, vector<16x128xbf16>, vector<8x128xf32> -> vector<8x128xf32>
    %c0_3 = arith.constant 0 : index
    %c0_4 = arith.constant 0 : index
    %4 = vector.load %arg3[%c0_3, %c0_4] : memref<1x128xf32, #tpu.memory_space<vmem>>, vector<1x128xf32>
    %5 = vector.broadcast %4 : vector<1x128xf32> to vector<8x128xf32>
    %6 = arith.addf %3, %5 : vector<8x128xf32>
    %cst_5 = arith.constant 0.000000e+00 : f32
    %7 = vector.broadcast %cst_5 : f32 to vector<8x128xf32>
    %8 = arith.maximumf %6, %7 : vector<8x128xf32>
    %9 = arith.truncf %8 : vector<8x128xf32> to vector<8x128xbf16>
    %c0_6 = arith.constant 0 : index
    %c0_7 = arith.constant 0 : index
    %10 = vector.load %arg4[%c0_6, %c0_7] : memref<128x128xbf16, #tpu.memory_space<vmem>>, vector<128x128xbf16>
    %cst_8 = arith.constant dense<0.000000e+00> : vector<8x128xf32>
    %11 = tpu.matmul %9, %10, %cst_8 {dimension_numbers = #tpu.dot_dimension_numbers<[1], [0], [0], [1], [0, 0, 1, 1], [], []>} : vector<8x128xbf16>, vector<128x128xbf16>, vector<8x128xf32> -> vector<8x128xf32>
    %c0_9 = arith.constant 0 : index
    %c0_10 = arith.constant 0 : index
    %12 = vector.load %arg5[%c0_9, %c0_10] : memref<1x128xf32, #tpu.memory_space<vmem>>, vector<1x128xf32>
    %13 = vector.broadcast %12 : vector<1x128xf32> to vector<8x128xf32>
    %14 = arith.addf %11, %13 : vector<8x128xf32>
    %cst_11 = arith.constant 0.000000e+00 : f32
    %15 = vector.broadcast %cst_11 : f32 to vector<8x128xf32>
    %16 = arith.maximumf %14, %15 : vector<8x128xf32>
    %17 = arith.truncf %16 : vector<8x128xf32> to vector<8x128xbf16>
    %c0_12 = arith.constant 0 : index
    %c0_13 = arith.constant 0 : index
    %18 = vector.load %arg6[%c0_12, %c0_13] : memref<128x128xbf16, #tpu.memory_space<vmem>>, vector<128x128xbf16>
    %cst_14 = arith.constant dense<0.000000e+00> : vector<8x128xf32>
    %19 = tpu.matmul %17, %18, %cst_14 {dimension_numbers = #tpu.dot_dimension_numbers<[1], [0], [0], [1], [0, 0, 1, 1], [], []>} : vector<8x128xbf16>, vector<128x128xbf16>, vector<8x128xf32> -> vector<8x128xf32>
    %c0_15 = arith.constant 0 : index
    %c0_16 = arith.constant 0 : index
    %20 = vector.load %arg7[%c0_15, %c0_16] : memref<1x128xf32, #tpu.memory_space<vmem>>, vector<1x128xf32>
    %21 = vector.broadcast %20 : vector<1x128xf32> to vector<8x128xf32>
    %22 = arith.addf %19, %21 : vector<8x128xf32>
    %cst_17 = arith.constant 0.000000e+00 : f32
    %23 = vector.broadcast %cst_17 : f32 to vector<8x128xf32>
    %24 = arith.maximumf %22, %23 : vector<8x128xf32>
    %25 = arith.truncf %24 : vector<8x128xf32> to vector<8x128xbf16>
    %c0_18 = arith.constant 0 : index
    %c0_19 = arith.constant 0 : index
    %26 = vector.load %arg8[%c0_18, %c0_19] : memref<128x128xbf16, #tpu.memory_space<vmem>>, vector<128x128xbf16>
    %cst_20 = arith.constant dense<0.000000e+00> : vector<8x128xf32>
    %27 = tpu.matmul %25, %26, %cst_20 {dimension_numbers = #tpu.dot_dimension_numbers<[1], [0], [0], [1], [0, 0, 1, 1], [], []>} : vector<8x128xbf16>, vector<128x128xbf16>, vector<8x128xf32> -> vector<8x128xf32>
    %c0_21 = arith.constant 0 : index
    %c0_22 = arith.constant 0 : index
    %28 = vector.load %arg9[%c0_21, %c0_22] : memref<1x128xf32, #tpu.memory_space<vmem>>, vector<1x128xf32>
    %29 = vector.broadcast %28 : vector<1x128xf32> to vector<8x128xf32>
    %30 = arith.addf %27, %29 : vector<8x128xf32>
    %c0_23 = arith.constant 0 : index
    %c0_24 = arith.constant 0 : index
    %31 = vector.load %arg10[%c0_23, %c0_24] : memref<8x128xf32, #tpu.memory_space<vmem>>, vector<8x128xf32>
    tpu.vector_store %arg10[%c0_23, %c0_24], %30 {strides = array<i32>} : memref<8x128xf32, #tpu.memory_space<vmem>>, vector<8x128xf32>,
    return
  }
  func.func @transform_0(%arg0: i32) -> (i32, i32) {
    %c0_i32 = arith.constant 0 : i32
    %c0_i32_0 = arith.constant 0 : i32
    return %arg0, %c0_i32 : i32, i32
  }
  func.func @transform_1(%arg0: i32) -> (i32, i32) {
    %c0_i32 = arith.constant 0 : i32
    %c0_i32_0 = arith.constant 0 : i32
    %c0_i32_1 = arith.constant 0 : i32
    return %c0_i32, %c0_i32_0 : i32, i32
  }
  func.func @transform_2(%arg0: i32) -> (i32, i32) {
    %c0_i32 = arith.constant 0 : i32
    %c0_i32_0 = arith.constant 0 : i32
    %c0_i32_1 = arith.constant 0 : i32
    return %c0_i32, %c0_i32_0 : i32, i32
  }
  func.func @transform_3(%arg0: i32) -> (i32, i32) {
    %c0_i32 = arith.constant 0 : i32
    %c0_i32_0 = arith.constant 0 : i32
    %c0_i32_1 = arith.constant 0 : i32
    return %c0_i32, %c0_i32_0 : i32, i32
  }
  func.func @transform_4(%arg0: i32) -> (i32, i32) {
    %c0_i32 = arith.constant 0 : i32
    %c0_i32_0 = arith.constant 0 : i32
    %c0_i32_1 = arith.constant 0 : i32
    return %c0_i32, %c0_i32_0 : i32, i32
  }
  func.func @transform_5(%arg0: i32) -> (i32, i32) {
    %c0_i32 = arith.constant 0 : i32
    %c0_i32_0 = arith.constant 0 : i32
    %c0_i32_1 = arith.constant 0 : i32
    return %c0_i32, %c0_i32_0 : i32, i32
  }
  func.func @transform_6(%arg0: i32) -> (i32, i32) {
    %c0_i32 = arith.constant 0 : i32
    %c0_i32_0 = arith.constant 0 : i32
    %c0_i32_1 = arith.constant 0 : i32
    return %c0_i32, %c0_i32_0 : i32, i32
  }
  func.func @transform_7(%arg0: i32) -> (i32, i32) {
    %c0_i32 = arith.constant 0 : i32
    %c0_i32_0 = arith.constant 0 : i32
    %c0_i32_1 = arith.constant 0 : i32
    return %c0_i32, %c0_i32_0 : i32, i32
  }
  func.func @transform_8(%arg0: i32) -> (i32, i32) {
    %c0_i32 = arith.constant 0 : i32
    %c0_i32_0 = arith.constant 0 : i32
    %c0_i32_1 = arith.constant 0 : i32
    return %c0_i32, %c0_i32_0 : i32, i32
  }
  func.func @transform_9(%arg0: i32) -> (i32, i32) {
    %c0_i32 = arith.constant 0 : i32
    %c0_i32_0 = arith.constant 0 : i32
    return %arg0, %c0_i32 : i32, i32
  }
}

</mosaic_0001>

<llo_original>
// kernel: net_forward.1
$region0: #{net_forward.1}
  #allocation0 [shape = 'u32[]', space=smem, size = 0x4, offset = 0x4, fixed_abs, tag = 'smem constant byte address 0x4 - core index']
  #allocation1 [shape = 'u32[72,128]{1,0:T(1,128)}', space=vmem, size = 0x9000, scoped, tag = 'internal scratch']
  %s0 = inlined_call_operand.hbm [shape: f32[8,16], index: 0, kind: input, shape index: {}]
  %s1 = inlined_call_operand.hbm [shape: bf16[16,128], index: 1, kind: input, shape index: {}]
  %s2 = inlined_call_operand.vmem [shape: f32[1,128], index: 2, kind: input, shape index: {}]
  %s3 = inlined_call_operand.hbm [shape: bf16[128,128], index: 3, kind: input, shape index: {}]
  %s4 = inlined_call_operand.vmem [shape: f32[1,128], index: 4, kind: input, shape index: {}]
  %s5 = inlined_call_operand.hbm [shape: bf16[128,128], index: 5, kind: input, shape index: {}]
  %s6 = inlined_call_operand.vmem [shape: f32[1,128], index: 6, kind: input, shape index: {}]
  %s7 = inlined_call_operand.hbm [shape: bf16[128,128], index: 7, kind: input, shape index: {}]
  %s8 = inlined_call_operand.vmem [shape: f32[1,128], index: 8, kind: input, shape index: {}]
  %s9 = inlined_call_operand.vmem [shape: f32[8,128], index: 9, kind: output, shape index: {}]
  %s10 = sld [smem:[#allocation0]]
  $region66: #{net_forward.1} parent=0
    _
  %s12 = ssub.s32 1, %s10
  %s13 = scalar_select 0, %s12, %s10
  $region1: #{net_forward.1} parent=0
    #allocation2 [shape = 'u8[4096]{0}', space=vmem, size = 0x1000, scoped, tag = 'input window, operand 0, single buffered']
    #allocation3 [shape = 's32[1]{0}', space=sflag, size = 0x4, scoped, tag = 'scoped memory for net_forward.1']
    #allocation4 [shape = 'u8[4096]{0}', space=vmem, size = 0x1000, scoped, tag = 'input window, operand 1, single buffered']
    #allocation5 [shape = 's32[1]{0}', space=sflag, size = 0x4, scoped, tag = 'scoped memory for net_forward.1']
    #allocation6 [shape = 'u8[32768]{0}', space=vmem, size = 0x8000, scoped, tag = 'input window, operand 3, single buffered']
    #allocation7 [shape = 'u8[32768]{0}', space=vmem, size = 0x8000, scoped, tag = 'input window, operand 5, single buffered']
    #allocation8 [shape = 's32[1]{0}', space=sflag, size = 0x4, scoped, tag = 'scoped memory for net_forward.1']
    #allocation9 [shape = 'u8[32768]{0}', space=vmem, size = 0x8000, scoped, tag = 'input window, operand 7, single buffered']
    %14 = vsyncpa [#allocation3], 0
    %15 = vsyncpa [#allocation5], 0
    %16 = vsyncpa [#allocation8], 0
    // Predicated region
    $region2: #{net_forward.1} parent=1 // pred_check
      _
    $region3: #{net_forward.1} parent=1 // pred_check_branch
      %18 = sbr.rel (0) target = $region5
    $region4: #{net_forward.1} parent=1 // pred_region
      %20 = vsyncadd [#allocation3], 0
      %s22 = sshll.u32 %s0, 4
      %s23 = int_to_ptr.hbm [resolvable:$true] %s22
      %s24 = sshll.u32 [#allocation2], 4
      %s25 = int_to_ptr.vmem [resolvable:$true] %s24
      %27 = dma.hbm_to_vmem [thread:$0]  %s23, 128, %s25, [#allocation3]
    $region5: #{net_forward.1} parent=1 // pred_fallthru
      _
    // Predicated region
    $region6: #{net_forward.1} parent=1 // pred_check
      _
    $region7: #{net_forward.1} parent=1 // pred_check_branch
      %29 = sbr.rel (0) target = $region9
    $region8: #{net_forward.1} parent=1 // pred_region
      %31 = vsyncadd [#allocation5], 0
      %s32 = sshll.u32 %s1, 4
      %s33 = int_to_ptr.hbm [resolvable:$true] %s32
      %s34 = sshll.u32 [#allocation4], 4
      %s35 = int_to_ptr.vmem [resolvable:$true] %s34
      %40 = dma.hbm_to_vmem [thread:$0]  %s33, 128, %s35, [#allocation5], 64, 64, 4
    $region9: #{net_forward.1} parent=1 // pred_fallthru
      _
    // Predicated region
    $region10: #{net_forward.1} parent=1 // pred_check
      _
    $region11: #{net_forward.1} parent=1 // pred_check_branch
      %42 = sbr.rel (0) target = $region13
    $region12: #{net_forward.1} parent=1 // pred_region
      _
    $region13: #{net_forward.1} parent=1 // pred_fallthru
      _
    // Predicated region
    $region14: #{net_forward.1} parent=1 // pred_check
      _
    $region15: #{net_forward.1} parent=1 // pred_check_branch
      %44 = sbr.rel (0) target = $region17
    $region16: #{net_forward.1} parent=1 // pred_region
      %46 = vsyncadd [#allocation5], 0
      %s47 = sshll.u32 %s3, 4
      %s48 = int_to_ptr.hbm [resolvable:$true] %s47
      %s49 = sshll.u32 [#allocation6], 4
      %s50 = int_to_ptr.vmem [resolvable:$true] %s49
      %55 = dma.hbm_to_vmem [thread:$0]  %s48, 1024, %s50, [#allocation5], 64, 64, 4
    $region17: #{net_forward.1} parent=1 // pred_fallthru
      _
    // Predicated region
    $region18: #{net_forward.1} parent=1 // pred_check
      _
    $region19: #{net_forward.1} parent=1 // pred_check_branch
      %57 = sbr.rel (0) target = $region21
    $region20: #{net_forward.1} parent=1 // pred_region
      _
    $region21: #{net_forward.1} parent=1 // pred_fallthru
      _
    // Predicated region
    $region22: #{net_forward.1} parent=1 // pred_check
      _
    $region23: #{net_forward.1} parent=1 // pred_check_branch
      %59 = sbr.rel (0) target = $region25
    $region24: #{net_forward.1} parent=1 // pred_region
      %61 = vsyncadd [#allocation8], 0
      %s62 = sshll.u32 %s5, 4
      %s63 = int_to_ptr.hbm [resolvable:$true] %s62
      %s64 = sshll.u32 [#allocation7], 4
      %s65 = int_to_ptr.vmem [resolvable:$true] %s64
      %70 = dma.hbm_to_vmem [thread:$0]  %s63, 1024, %s65, [#allocation8], 64, 64, 4
    $region25: #{net_forward.1} parent=1 // pred_fallthru
      _
    // Predicated region
    $region26: #{net_forward.1} parent=1 // pred_check
      _
    $region27: #{net_forward.1} parent=1 // pred_check_branch
      %72 = sbr.rel (0) target = $region29
    $region28: #{net_forward.1} parent=1 // pred_region
      _
    $region29: #{net_forward.1} parent=1 // pred_fallthru
      _
    // Predicated region
    $region30: #{net_forward.1} parent=1 // pred_check
      _
    $region31: #{net_forward.1} parent=1 // pred_check_branch
      %74 = sbr.rel (0) target = $region33
    $region32: #{net_forward.1} parent=1 // pred_region
      %76 = vsyncadd [#allocation8], 0
      %s77 = sshll.u32 %s7, 4
      %s78 = int_to_ptr.hbm [resolvable:$true] %s77
      %s79 = sshll.u32 [#allocation9], 4
      %s80 = int_to_ptr.vmem [resolvable:$true] %s79
      %85 = dma.hbm_to_vmem [thread:$0]  %s78, 1024, %s80, [#allocation8], 64, 64, 4
    $region33: #{net_forward.1} parent=1 // pred_fallthru
      _
    // Predicated region
    $region34: #{net_forward.1} parent=1 // pred_check
      _
    $region35: #{net_forward.1} parent=1 // pred_check_branch
      %87 = sbr.rel (0) target = $region37
    $region36: #{net_forward.1} parent=1 // pred_region
      _
    $region37: #{net_forward.1} parent=1 // pred_fallthru
      _
    // Predicated region
    $region38: #{net_forward.1} parent=1 // pred_check
      _
    $region39: #{net_forward.1} parent=1 // pred_check_branch
      %89 = sbr.rel (0) target = $region41
    $region40: #{net_forward.1} parent=1 // pred_region
      %91 = dma.done [#allocation3], 128
    $region41: #{net_forward.1} parent=1 // pred_fallthru
      _
    // Predicated region
    $region42: #{net_forward.1} parent=1 // pred_check
      _
    $region43: #{net_forward.1} parent=1 // pred_check_branch
      %93 = sbr.rel (0) target = $region45
    $region44: #{net_forward.1} parent=1 // pred_region
      %95 = dma.done [#allocation5], 128
    $region45: #{net_forward.1} parent=1 // pred_fallthru
      _
    // Predicated region
    $region46: #{net_forward.1} parent=1 // pred_check
      _
    $region47: #{net_forward.1} parent=1 // pred_check_branch
      %97 = sbr.rel (0) target = $region49
    $region48: #{net_forward.1} parent=1 // pred_region
      %99 = dma.done [#allocation5], 1024
    $region49: #{net_forward.1} parent=1 // pred_fallthru
      _
    // Predicated region
    $region50: #{net_forward.1} parent=1 // pred_check
      _
    $region51: #{net_forward.1} parent=1 // pred_check_branch
      %101 = sbr.rel (0) target = $region53
    $region52: #{net_forward.1} parent=1 // pred_region
      %103 = dma.done [#allocation8], 1024
    $region53: #{net_forward.1} parent=1 // pred_fallthru
      _
    // Predicated region
    $region54: #{net_forward.1} parent=1 // pred_check
      _
    $region55: #{net_forward.1} parent=1 // pred_check_branch
      %105 = sbr.rel (0) target = $region57
    $region56: #{net_forward.1} parent=1 // pred_region
      %107 = dma.done [#allocation8], 1024
    $region57: #{net_forward.1} parent=1 // pred_fallthru
      _
    %v109 = vld [vmem:[#allocation2] sm:$0xff]
    %v110 = vpack.c.bf16 %v109, %v109
    %v111 = vld [vmem:[#allocation4] sm:$0xf]
    %v112 = vld [vmem:[#allocation4 + $0x4] sm:$0xf]
    %v113 = vld [vmem:[%s2] sm:$0x1]
    %v115 = vperm.slane %v113, 0
    %v119 = vunpack.c.l.b16 %v111
    %v120 = vunpack.c.l.b16 %v112
    %v121 = vpack.c.b16 %v120, %v119
    %vm123 = vcmask 130048
    %v125 = vsel %vm123, %v110, 0
    %127 = vmatpush.bf16.msra.mxu0 0
    %128 = vmatpush.bf16.msra.mxu0 0
    %129 = vmatpush.bf16.msra.mxu0 0
    %130 = vmatpush.bf16.msra.mxu0 0
    %131 = vmatpush.bf16.msra.mxu0 0
    %132 = vmatpush.bf16.msra.mxu0 0
    %133 = vmatpush.bf16.msra.mxu0 0
    %134 = vmatpush.bf16.msra.mxu0 %v121
    %135 = vmatmul.bf16.gmra.mxu0 %v125
    %v136 = vpop.f32.mrf.mxu0
    %v137 = vadd.f32 %v115, %v136
    %v138 = vpop.f32.mrf.mxu0
    %139 = vdwg.mxu0
    %v140 = vmax.f32 %v137, 0.0
    %v141 = vpack.c.bf16 %v140, %v140
    %v142 = vld [vmem:[#allocation6] sm:$0xf]
    %v143 = vld [vmem:[#allocation6 + $0x4] sm:$0xf]
    %v144 = vld [vmem:[#allocation6 + $0x8] sm:$0xf]
    %v145 = vld [vmem:[#allocation6 + $0xc] sm:$0xf]
    %v146 = vld [vmem:[#allocation6 + $0x10] sm:$0xf]
    %v147 = vld [vmem:[#allocation6 + $0x14] sm:$0xf]
    %v148 = vld [vmem:[#allocation6 + $0x18] sm:$0xf]
    %v149 = vld [vmem:[#allocation6 + $0x1c] sm:$0xf]
    %v150 = vld [vmem:[#allocation6 + $0x20] sm:$0xf]
    %v151 = vld [vmem:[#allocation6 + $0x24] sm:$0xf]
    %v152 = vld [vmem:[#allocation6 + $0x28] sm:$0xf]
    %v153 = vld [vmem:[#allocation6 + $0x2c] sm:$0xf]
    %v154 = vld [vmem:[#allocation6 + $0x30] sm:$0xf]
    %v155 = vld [vmem:[#allocation6 + $0x34] sm:$0xf]
    %v156 = vld [vmem:[#allocation6 + $0x38] sm:$0xf]
    %v157 = vld [vmem:[#allocation6 + $0x3c] sm:$0xf]
    %v158 = vld [vmem:[%s4] sm:$0x1]
    %v160 = vperm.slane %v158, 0
    %v178 = vunpack.c.l.b16 %v142
    %v179 = vunpack.c.l.b16 %v143
    %v180 = vunpack.c.l.b16 %v144
    %v181 = vunpack.c.l.b16 %v145
    %v182 = vunpack.c.l.b16 %v146
    %v183 = vunpack.c.l.b16 %v147
    %v184 = vunpack.c.l.b16 %v148
    %v185 = vunpack.c.l.b16 %v149
    %v186 = vunpack.c.l.b16 %v150
    %v187 = vunpack.c.l.b16 %v151
    %v188 = vunpack.c.l.b16 %v152
    %v189 = vunpack.c.l.b16 %v153
    %v190 = vunpack.c.l.b16 %v154
    %v191 = vunpack.c.l.b16 %v155
    %v192 = vunpack.c.l.b16 %v156
    %v193 = vunpack.c.l.b16 %v157
    %v194 = vpack.c.b16 %v179, %v178
    %v195 = vpack.c.b16 %v181, %v180
    %v196 = vpack.c.b16 %v183, %v182
    %v197 = vpack.c.b16 %v185, %v184
    %v198 = vpack.c.b16 %v187, %v186
    %v199 = vpack.c.b16 %v189, %v188
    %v200 = vpack.c.b16 %v191, %v190
    %v201 = vpack.c.b16 %v193, %v192
    %210 = vmatpush.bf16.msra.mxu0 %v201
    %211 = vmatpush.bf16.msra.mxu0 %v200
    %212 = vmatpush.bf16.msra.mxu0 %v199
    %213 = vmatpush.bf16.msra.mxu0 %v198
    %214 = vmatpush.bf16.msra.mxu0 %v197
    %215 = vmatpush.bf16.msra.mxu0 %v196
    %216 = vmatpush.bf16.msra.mxu0 %v195
    %217 = vmatpush.bf16.msra.mxu0 %v194
    %218 = vmatmul.bf16.gmra.mxu0 %v141
    %v219 = vpop.f32.mrf.mxu0
    %v220 = vadd.f32 %v160, %v219
    %v221 = vpop.f32.mrf.mxu0
    %222 = vdwg.mxu0
    %v223 = vmax.f32 %v220, 0.0
    %v224 = vpack.c.bf16 %v223, %v223
    %v225 = vld [vmem:[#allocation7] sm:$0xf]
    %v226 = vld [vmem:[#allocation7 + $0x4] sm:$0xf]
    %v227 = vld [vmem:[#allocation7 + $0x8] sm:$0xf]
    %v228 = vld [vmem:[#allocation7 + $0xc] sm:$0xf]
    %v229 = vld [vmem:[#allocation7 + $0x10] sm:$0xf]
    %v230 = vld [vmem:[#allocation7 + $0x14] sm:$0xf]
    %v231 = vld [vmem:[#allocation7 + $0x18] sm:$0xf]
    %v232 = vld [vmem:[#allocation7 + $0x1c] sm:$0xf]
    %v233 = vld [vmem:[#allocation7 + $0x20] sm:$0xf]
    %v234 = vld [vmem:[#allocation7 + $0x24] sm:$0xf]
    %v235 = vld [vmem:[#allocation7 + $0x28] sm:$0xf]
    %v236 = vld [vmem:[#allocation7 + $0x2c] sm:$0xf]
    %v237 = vld [vmem:[#allocation7 + $0x30] sm:$0xf]
    %v238 = vld [vmem:[#allocation7 + $0x34] sm:$0xf]
    %v239 = vld [vmem:[#allocation7 + $0x38] sm:$0xf]
    %v240 = vld [vmem:[#allocation7 + $0x3c] sm:$0xf]
    %v241 = vld [vmem:[%s6] sm:$0x1]
    %v243 = vperm.slane %v241, 0
    %v261 = vunpack.c.l.b16 %v225
    %v262 = vunpack.c.l.b16 %v226
    %v263 = vunpack.c.l.b16 %v227
    %v264 = vunpack.c.l.b16 %v228
    %v265 = vunpack.c.l.b16 %v229
    %v266 = vunpack.c.l.b16 %v230
    %v267 = vunpack.c.l.b16 %v231
    %v268 = vunpack.c.l.b16 %v232
    %v269 = vunpack.c.l.b16 %v233
    %v270 = vunpack.c.l.b16 %v234
    %v271 = vunpack.c.l.b16 %v235
    %v272 = vunpack.c.l.b16 %v236
    %v273 = vunpack.c.l.b16 %v237
    %v274 = vunpack.c.l.b16 %v238
    %v275 = vunpack.c.l.b16 %v239
    %v276 = vunpack.c.l.b16 %v240
    %v277 = vpack.c.b16 %v262, %v261
    %v278 = vpack.c.b16 %v264, %v263
    %v279 = vpack.c.b16 %v266, %v265
    %v280 = vpack.c.b16 %v268, %v267
    %v281 = vpack.c.b16 %v270, %v269
    %v282 = vpack.c.b16 %v272, %v271
    %v283 = vpack.c.b16 %v274, %v273
    %v284 = vpack.c.b16 %v276, %v275
    %293 = vmatpush.bf16.msra.mxu0 %v284
    %294 = vmatpush.bf16.msra.mxu0 %v283
    %295 = vmatpush.bf16.msra.mxu0 %v282
    %296 = vmatpush.bf16.msra.mxu0 %v281
    %297 = vmatpush.bf16.msra.mxu0 %v280
    %298 = vmatpush.bf16.msra.mxu0 %v279
    %299 = vmatpush.bf16.msra.mxu0 %v278
    %300 = vmatpush.bf16.msra.mxu0 %v277
    %301 = vmatmul.bf16.gmra.mxu0 %v224
    %v302 = vpop.f32.mrf.mxu0
    %v303 = vadd.f32 %v243, %v302
    %v304 = vpop.f32.mrf.mxu0
    %305 = vdwg.mxu0
    %v306 = vmax.f32 %v303, 0.0
    %v307 = vpack.c.bf16 %v306, %v306
    %v308 = vld [vmem:[#allocation9] sm:$0xf]
    %v309 = vld [vmem:[#allocation9 + $0x4] sm:$0xf]
    %v310 = vld [vmem:[#allocation9 + $0x8] sm:$0xf]
    %v311 = vld [vmem:[#allocation9 + $0xc] sm:$0xf]
    %v312 = vld [vmem:[#allocation9 + $0x10] sm:$0xf]
    %v313 = vld [vmem:[#allocation9 + $0x14] sm:$0xf]
    %v314 = vld [vmem:[#allocation9 + $0x18] sm:$0xf]
    %v315 = vld [vmem:[#allocation9 + $0x1c] sm:$0xf]
    %v316 = vld [vmem:[#allocation9 + $0x20] sm:$0xf]
    %v317 = vld [vmem:[#allocation9 + $0x24] sm:$0xf]
    %v318 = vld [vmem:[#allocation9 + $0x28] sm:$0xf]
    %v319 = vld [vmem:[#allocation9 + $0x2c] sm:$0xf]
    %v320 = vld [vmem:[#allocation9 + $0x30] sm:$0xf]
    %v321 = vld [vmem:[#allocation9 + $0x34] sm:$0xf]
    %v322 = vld [vmem:[#allocation9 + $0x38] sm:$0xf]
    %v323 = vld [vmem:[#allocation9 + $0x3c] sm:$0xf]
    %v324 = vld [vmem:[%s8] sm:$0x1]
    %v326 = vperm.slane %v324, 0
    %v344 = vunpack.c.l.b16 %v308
    %v345 = vunpack.c.l.b16 %v309
    %v346 = vunpack.c.l.b16 %v310
    %v347 = vunpack.c.l.b16 %v311
    %v348 = vunpack.c.l.b16 %v312
    %v349 = vunpack.c.l.b16 %v313
    %v350 = vunpack.c.l.b16 %v314
    %v351 = vunpack.c.l.b16 %v315
    %v352 = vunpack.c.l.b16 %v316
    %v353 = vunpack.c.l.b16 %v317
    %v354 = vunpack.c.l.b16 %v318
    %v355 = vunpack.c.l.b16 %v319
    %v356 = vunpack.c.l.b16 %v320
    %v357 = vunpack.c.l.b16 %v321
    %v358 = vunpack.c.l.b16 %v322
    %v359 = vunpack.c.l.b16 %v323
    %v360 = vpack.c.b16 %v345, %v344
    %v361 = vpack.c.b16 %v347, %v346
    %v362 = vpack.c.b16 %v349, %v348
    %v363 = vpack.c.b16 %v351, %v350
    %v364 = vpack.c.b16 %v353, %v352
    %v365 = vpack.c.b16 %v355, %v354
    %v366 = vpack.c.b16 %v357, %v356
    %v367 = vpack.c.b16 %v359, %v358
    %376 = vmatpush.bf16.msra.mxu0 %v367
    %377 = vmatpush.bf16.msra.mxu0 %v366
    %378 = vmatpush.bf16.msra.mxu0 %v365
    %379 = vmatpush.bf16.msra.mxu0 %v364
    %380 = vmatpush.bf16.msra.mxu0 %v363
    %381 = vmatpush.bf16.msra.mxu0 %v362
    %382 = vmatpush.bf16.msra.mxu0 %v361
    %383 = vmatpush.bf16.msra.mxu0 %v360
    %384 = vmatmul.bf16.gmra.mxu0 %v307
    %v385 = vpop.f32.mrf.mxu0
    %v386 = vadd.f32 %v326, %v385
    %v387 = vpop.f32.mrf.mxu0
    %388 = vdwg.mxu0
    %389 = vst [vmem:[%s9] sm:$0xff] %v386
    // Predicated region
    $region58: #{net_forward.1} parent=1 // pred_check
      _
    $region59: #{net_forward.1} parent=1 // pred_check_branch
      %391 = sbr.rel (0) target = $region61
    $region60: #{net_forward.1} parent=1 // pred_region
      _
    $region61: #{net_forward.1} parent=1 // pred_fallthru
      _
    // Predicated region
    $region62: #{net_forward.1} parent=1 // pred_check
      _
    $region63: #{net_forward.1} parent=1 // pred_check_branch
      %393 = sbr.rel (0) target = $region65
    $region64: #{net_forward.1} parent=1 // pred_region
      _
    $region65: #{net_forward.1} parent=1 // pred_fallthru
      _
    %394 = vsyncpa [#allocation3], 1
    %395 = vsyncpa [#allocation5], 1
    %396 = vsyncpa [#allocation8], 1

</llo_original>
